<compile_context>
chip_gen: v5e
topology: v5e:2x2
jax: 0.10.0
libtpu: 0.0.40
codegen_flags: <defaults>
</compile_context>

<pallas_src>
import functools

import jax
import jax.numpy as jnp
from jax.experimental import pallas as pl
from jax.experimental.pallas import tpu as pltpu


@functools.lru_cache(maxsize=1)
def _chip_defaults():
    """(max_chunks, min_chunk_bytes, issue_cores) tuned per TPU generation."""
    kind = ""
    try:
        kind = jax.devices()[0].device_kind.lower()
    except Exception:
        pass
    if "v7" in kind or "7x" in kind:
        # ~3.2 TB/s HBM, 2 TensorCores/chip: more + larger in-flight DMAs and
        # descriptor issue split across both cores.
        return 16, 2 << 20, 2
    if "v6" in kind:
        # ~1.4 TB/s HBM: 8 chunks of >=1 MiB already saturate.
        return 8, 1 << 20, 1
    if "v5" in kind:
        # ~0.8 TB/s HBM: keep chunking conservative (fewer, larger DMAs).
        return 6, 2 << 20, 1
    return 8, 1 << 20, 1


def _sublane_rows(dtype) -> int:
    itemsize = jnp.dtype(dtype).itemsize
    return {1: 32, 2: 16, 4: 8}.get(itemsize, 8)


def _build_chunks(lead, n_target, align):
    """Split [0, lead) into <= n_target pieces whose starts are `align`-multiples."""
    if n_target <= 1 or lead <= align:
        return [(0, lead)]
    base = -(-lead // n_target)           # ceil(lead / n_target)
    base = -(-base // align) * align      # round up to a multiple of align
    chunks = []
    start = 0
    while start < lead:
        size = min(base, lead - start)
        chunks.append((start, size))
        start += size
    return chunks


def _make_clone_kernel(chunk_groups, lead):
    """Kernel issuing chunked HBM->HBM DMAs; each grid program owns one group.

    `chunk_groups` is a static tuple of groups; each group is a tuple of
    (global_chunk_index, (start, size)) slices along the leading axis.
    """

    def kernel(x_ref, o_ref, copy_sems):
        pid = pl.program_id(0)
        for core, group in enumerate(chunk_groups):

            @pl.when(pid == core)
            def _(group=group):
                # Start every DMA in this program's share first (all in
                # flight on the DMA engines), then wait for all of them.
                copies = []
                for c, (start, size) in group:
                    if start == 0 and size == lead:
                        cp = pltpu.make_async_copy(x_ref, o_ref, copy_sems.at[c])
                    else:
                        cp = pltpu.make_async_copy(
                            x_ref.at[pl.ds(start, size)],
                            o_ref.at[pl.ds(start, size)],
                            copy_sems.at[c],
                        )
                    cp.start()
                    copies.append(cp)
                for cp in copies:
                    cp.wait()

    return kernel


def clone(x: jax.Array, *, max_chunks=None, min_chunk_bytes=None,
          issue_cores=None) -> jax.Array:
    """Pallas equivalent of torch.Tensor.clone(): a new buffer with identical
    values, shape, and dtype (never aliases the input)."""
    d_max_chunks, d_min_bytes, d_cores = _chip_defaults()
    max_chunks = d_max_chunks if max_chunks is None else int(max_chunks)
    min_chunk_bytes = d_min_bytes if min_chunk_bytes is None else int(min_chunk_bytes)
    issue_cores = d_cores if issue_cores is None else int(issue_cores)

    orig_shape = x.shape
    x_in = x.reshape((1,)) if x.ndim == 0 else x

    if x_in.size == 0:
        # Degenerate empty tensor: nothing to copy, return a fresh empty.
        return jnp.zeros(orig_shape, x.dtype)

    total_bytes = x_in.size * jnp.dtype(x_in.dtype).itemsize
    nd = x_in.ndim
    sub = _sublane_rows(x_in.dtype)

    # Pick a layout-preserving (free) view whose leading axis we can chunk.
    if nd <= 1:
        view, align, chunkable = x_in, 1, False      # whole-ref single DMA
    elif x_in.shape[-2] % sub == 0:
        # Plane boundaries line up with sublane tiles -> collapsing everything
        # but the last dim keeps the HBM tiled layout bit-identical.
        view, align, chunkable = x_in.reshape((-1, x_in.shape[-1])), sub, True
    elif nd >= 3:
        # Keep the last two (tiled) dims intact; collapsing leading dims is free.
        view, align, chunkable = x_in.reshape((-1,) + x_in.shape[-2:]), 1, True
    else:  # nd == 2 with a ragged sublane dim
        view, align, chunkable = x_in, sub, True

    lead = view.shape[0]
    if not chunkable:
        chunks = [(0, lead)]
    else:
        n_target = int(max(1, min(max_chunks, total_bytes // max(1, min_chunk_bytes))))
        chunks = _build_chunks(lead, n_target, align)

    # Round-robin the chunks across the issuing programs (TensorCores on v7x).
    indexed = list(enumerate(chunks))
    n_cores = max(1, issue_cores)
    groups = tuple(tuple(indexed[c::n_cores]) for c in range(n_cores))
    groups = tuple(g for g in groups if g)

    out = pl.pallas_call(
        _make_clone_kernel(groups, lead),
        grid=(len(groups),),
        out_shape=jax.ShapeDtypeStruct(view.shape, view.dtype),
        in_specs=[pl.BlockSpec(memory_space=pl.ANY)],   # stay in HBM
        out_specs=pl.BlockSpec(memory_space=pl.ANY),    # stay in HBM
        scratch_shapes=[pltpu.SemaphoreType.DMA((len(chunks),))],
        compiler_params=pltpu.CompilerParams(dimension_semantics=("parallel",)),
        cost_estimate=pl.CostEstimate(
            flops=0, transcendentals=0, bytes_accessed=2 * total_bytes),
    )(view)

    return out.reshape(orig_shape)


if __name__ == "__main__":
    key = jax.random.PRNGKey(0)

    def _check(y, x):
        assert y.shape == x.shape, (y.shape, x.shape)
        assert y.dtype == x.dtype, (y.dtype, x.dtype)
        assert bool(jnp.array_equal(y, x)), "clone output does not match input"

    # Small NCHW tensor consistent with a typical moai tensor monad input.
    x = jax.random.normal(key, (2, 4, 16, 16), dtype=jnp.float32)
    _check(jax.block_until_ready(clone(x)), x)

    # Ragged (non-8/128-aligned) shape: 3-D collapse path, no padding needed.
    x_odd = jax.random.normal(jax.random.PRNGKey(1), (3, 5, 7), dtype=jnp.float32)
    _check(jax.block_until_ready(clone(x_odd)), x_odd)

    # Multi-chunk path (several DMAs in flight) via the collapsed 2-D view.
    x_big = jax.random.normal(jax.random.PRNGKey(2), (8, 64, 128), dtype=jnp.float32)
    _check(jax.block_until_ready(clone(x_big, min_chunk_bytes=32 * 1024)), x_big)

    # Dual-issue path (grid=(2,), chunk list split across programs).  Runs
    # sequentially-correct on 1-TC chips and in parallel on v7x.
    x_big2 = jax.random.normal(jax.random.PRNGKey(3), (16, 64, 128), dtype=jnp.float32)
    _check(jax.block_until_ready(
        clone(x_big2, issue_cores=2, max_chunks=8, min_chunk_bytes=32 * 1024)), x_big2)

    # 2-D bf16 with ragged leading dim: sublane-aligned chunk boundaries.
    x_bf = jax.random.normal(jax.random.PRNGKey(4), (40, 256), dtype=jnp.bfloat16)
    _check(jax.block_until_ready(
        clone(x_bf, max_chunks=4, min_chunk_bytes=2048)), x_bf)

    # 1-D and 0-D: whole-ref single DMA.
    x_1d = jax.random.normal(jax.random.PRNGKey(5), (1000,), dtype=jnp.float32)
    _check(jax.block_until_ready(clone(x_1d)), x_1d)
    x_0d = jnp.float32(3.5)
    _check(jax.block_until_ready(clone(x_0d)), x_0d)

    # Empty tensor.
    x_empty = jnp.zeros((0, 4), jnp.float32)
    _check(jax.block_until_ready(clone(x_empty)), x_empty)

    print("KERNEL_OK")
</pallas_src>

<mosaic_0001>
module attributes {stable_mosaic.version = 11 : i64} {
  func.func @kernel(%arg0: i32, %arg1: memref<128x16xf32, #tpu.memory_space<any>>, %arg2: memref<128x16xf32, #tpu.memory_space<any>>, %arg3: memref<1x!tpu.dma_semaphore, #tpu.memory_space<semaphore_mem>>) attributes {dimension_semantics = [#tpu.dimension_semantics<parallel>], iteration_bounds = array<i64: 1>, scalar_prefetch = 0 : i64, scratch_operands = 1 : i64, tpu.core_type = #tpu.core_type<tc>, window_params = [{}, {}]} {
    %c0_i32 = arith.constant 0 : i32
    %0 = arith.cmpi eq, %arg0, %c0_i32 : i32
    %1 = arith.extui %0 : i1 to i32
    %c0_i32_0 = arith.constant 0 : i32
    %2 = arith.cmpi ne, %1, %c0_i32_0 : i32
    scf.if %2 {
      %c0_i32_1 = arith.constant 0 : i32
      %3 = tpu.memref_slice %arg3[%c0_i32_1] : memref<1x!tpu.dma_semaphore, #tpu.memory_space<semaphore_mem>> -> memref<1x!tpu.dma_semaphore, #tpu.memory_space<semaphore_mem>>
      %4 = tpu.memref_squeeze %3 : memref<1x!tpu.dma_semaphore, #tpu.memory_space<semaphore_mem>> -> memref<!tpu.dma_semaphore, #tpu.memory_space<semaphore_mem>>
      tpu.enqueue_dma source(%arg1 : memref<128x16xf32, #tpu.memory_space<any>>) target(%arg2 : memref<128x16xf32, #tpu.memory_space<any>>) target_semaphore(%4 : memref<!tpu.dma_semaphore, #tpu.memory_space<semaphore_mem>>)
      %c0_i32_2 = arith.constant 0 : i32
      %5 = tpu.memref_slice %arg3[%c0_i32_2] : memref<1x!tpu.dma_semaphore, #tpu.memory_space<semaphore_mem>> -> memref<1x!tpu.dma_semaphore, #tpu.memory_space<semaphore_mem>>
      %6 = tpu.memref_squeeze %5 : memref<1x!tpu.dma_semaphore, #tpu.memory_space<semaphore_mem>> -> memref<!tpu.dma_semaphore, #tpu.memory_space<semaphore_mem>>
      tpu.wait_dma2 semaphore(%6 : memref<!tpu.dma_semaphore, #tpu.memory_space<semaphore_mem>>) src(%arg1 : memref<128x16xf32, #tpu.memory_space<any>>) dst(%arg2 : memref<128x16xf32, #tpu.memory_space<any>>)
    } else {
    }
    return
  }
}

</mosaic_0001>

<llo_original>
// kernel: tpu_custom_call.1
$region0: #{tpu_custom_call.1}
  #allocation0 [shape = 'u32[]', space=smem, size = 0x4, offset = 0x4, fixed_abs, tag = 'smem constant byte address 0x4 - core index']
  #allocation1 [shape = 'u32[72,128]{1,0:T(1,128)}', space=vmem, size = 0x9000, scoped, tag = 'internal scratch']
  #allocation2 [shape = 's32[1]{0}', space=sflag, size = 0x4, scoped, tag = 'scratch operand']
  #allocation3 [shape = 's32[]', space=sflag, size = 0x4, offset = 0, fixed_abs, tag = 'sflag constant byte address 0x0 - dummy sync flag']
  %s0 = inlined_call_operand.vmem [shape: f32[128,16], index: 0, kind: input, shape index: {}]
  %s1 = inlined_call_operand.vmem [shape: f32[128,16], index: 1, kind: output, shape index: {}]
  %s2 = sld [smem:[#allocation0]]
  $region25: #{tpu_custom_call.1} parent=0
    _
  %s4 = ssub.s32 1, %s2
  %s5 = scalar_select 0, %s4, %s2
  %p6 = scmp.eq.s32.totalorder 0, 0
  // Predicated region
  $region2: #{tpu_custom_call.1} parent=0 // pred_check
    %p7 = pneg %p6
  $region3: #{tpu_custom_call.1} parent=0 // pred_check_branch
    %9 = sbr.rel (%p7) target = $region5
  $region4: #{tpu_custom_call.1} parent=0 // pred_region
    // Predicated region
    $region6: #{tpu_custom_call.1} parent=4 // pred_check
      _
    $region7: #{tpu_custom_call.1} parent=4 // pred_check_branch
      %11 = sbr.rel (0) target = $region9
    $region8: #{tpu_custom_call.1} parent=4 // pred_region
      loop: start=0, step=1, limit=1
      $region10: #{tpu_custom_call.1} parent=8 // loop_pre_header
        _
      $region11: #{tpu_custom_call.1} parent=8 // loop_header
        %s13 = sphi 0, %s17
        %p14 = scmp.ge.s32.totalorder %s13, 1
        %s18 = sphi %s0, %s0
        %s19 = sphi %s1, %s1
      $region12: #{tpu_custom_call.1} parent=8 // loop_header_branch
        %16 = sbr.rel (%p14) target = $region16
      $region13: #{tpu_custom_call.1} parent=8 // loop_body
        %v20 = vld [vmem:[%s18] sm:$0xff]
        %21 = vst [vmem:[%s19] sm:$0xff] %v20
        %v22 = vld [vmem:[%s18 + $0x8] sm:$0xff]
        %23 = vst [vmem:[%s19 + $0x8] sm:$0xff] %v22
        %v24 = vld [vmem:[%s18 + $0x10] sm:$0xff]
        %25 = vst [vmem:[%s19 + $0x10] sm:$0xff] %v24
        %v26 = vld [vmem:[%s18 + $0x18] sm:$0xff]
        %27 = vst [vmem:[%s19 + $0x18] sm:$0xff] %v26
        %v28 = vld [vmem:[%s18 + $0x20] sm:$0xff]
        %29 = vst [vmem:[%s19 + $0x20] sm:$0xff] %v28
        %v30 = vld [vmem:[%s18 + $0x28] sm:$0xff]
        %31 = vst [vmem:[%s19 + $0x28] sm:$0xff] %v30
        %v32 = vld [vmem:[%s18 + $0x30] sm:$0xff]
        %33 = vst [vmem:[%s19 + $0x30] sm:$0xff] %v32
        %v34 = vld [vmem:[%s18 + $0x38] sm:$0xff]
        %35 = vst [vmem:[%s19 + $0x38] sm:$0xff] %v34
        %v36 = vld [vmem:[%s18 + $0x40] sm:$0xff]
        %37 = vst [vmem:[%s19 + $0x40] sm:$0xff] %v36
        %v38 = vld [vmem:[%s18 + $0x48] sm:$0xff]
        %39 = vst [vmem:[%s19 + $0x48] sm:$0xff] %v38
        %v40 = vld [vmem:[%s18 + $0x50] sm:$0xff]
        %41 = vst [vmem:[%s19 + $0x50] sm:$0xff] %v40
        %v42 = vld [vmem:[%s18 + $0x58] sm:$0xff]
        %43 = vst [vmem:[%s19 + $0x58] sm:$0xff] %v42
        %v44 = vld [vmem:[%s18 + $0x60] sm:$0xff]
        %45 = vst [vmem:[%s19 + $0x60] sm:$0xff] %v44
        %v46 = vld [vmem:[%s18 + $0x68] sm:$0xff]
        %47 = vst [vmem:[%s19 + $0x68] sm:$0xff] %v46
        %v48 = vld [vmem:[%s18 + $0x70] sm:$0xff]
        %49 = vst [vmem:[%s19 + $0x70] sm:$0xff] %v48
        %v50 = vld [vmem:[%s18 + $0x78] sm:$0xff]
        %51 = vst [vmem:[%s19 + $0x78] sm:$0xff] %v50
      $region14: #{tpu_custom_call.1} parent=8 // loop_footer
        %s17 = sadd.s32 1, %s13
      $region15: #{tpu_custom_call.1} parent=8 // loop_footer_branch
        %12 = sbr.rel target = $region11
      $region16: #{tpu_custom_call.1} parent=8 // loop_exit
        _
    $region9: #{tpu_custom_call.1} parent=4 // pred_fallthru
      _
    // Predicated region
    $region17: #{tpu_custom_call.1} parent=4 // pred_check
      _
    $region18: #{tpu_custom_call.1} parent=4 // pred_check_branch
      %53 = sbr.rel target = $region20
    $region19: #{tpu_custom_call.1} parent=4 // pred_region
      _
    $region20: #{tpu_custom_call.1} parent=4 // pred_fallthru
      _
    // Predicated region
    $region21: #{tpu_custom_call.1} parent=4 // pred_check
      _
    $region22: #{tpu_custom_call.1} parent=4 // pred_check_branch
      %56 = sbr.rel (0) target = $region24
    $region23: #{tpu_custom_call.1} parent=4 // pred_region
      %57 = vsyncadd [#allocation2], 2048
    $region24: #{tpu_custom_call.1} parent=4 // pred_fallthru
      _
    %s58 = smul.u32 128, 1
    %s59 = sshll.u32 %s58, 4
    %60 = dma.done [#allocation2], %s59
  $region5: #{tpu_custom_call.1} parent=0 // pred_fallthru
    _
  %61 = vsyncmov [#allocation2]
  %s62 = vpop.sfrf %61
  %p63 = scmp.eq.s32.totalorder %s62, 0
  %p64 = pneg %p63
  %66 = shalt.err (%p64)

</llo_original>
